<compile_context>
chip_gen: v7x
topology: tpu7x:2x2x1
jax: 0.10.0
libtpu: 0.0.40
codegen_flags: <defaults>
</compile_context>

<pallas_src>
import jax
import jax.numpy as jnp
from jax.experimental import pallas as pl
from jax.experimental.pallas import tpu as pltpu


def _conv_upsample_kernel(wt_ref, b_ref, x_ref, o_ref):
    # wt_ref: (4C, C)  folded weight (upsample identity already added)
    # b_ref:  (4C, 1)  tap-replicated bias, f32
    # x_ref:  (C, ts)  spatial slab straight from NCHW
    # o_ref:  (4C, ts) lane-dense output slab
    y = jnp.dot(wt_ref[...], x_ref[...], preferred_element_type=jnp.float32)  # MXU
    o_ref[...] = (y + b_ref[...]).astype(o_ref.dtype)


def _pick_tile(S, C, itemsize, ts_req=None):
    """Pick the spatial tile width (columns) under a VMEM budget, avoiding padding."""
    budget = 20 << 20                                  # live-bytes budget (fits v7x 64 MiB)
    weight_bytes = 4 * C * C * itemsize + 4 * C * 4
    per_col = 2 * (C + 4 * C) * itemsize + 4 * C * 4   # dbl-buffered x/out + f32 result
    cap = max((budget - weight_bytes) // per_col, 128)
    cap = min(int(cap), 8192)
    if ts_req is not None:
        cap = min(cap, max(int(ts_req), 1))
    if S <= cap:
        return S                                       # single tile / image, no padding
    t = (cap // 128) * 128
    while t >= 128:                                    # 128-aligned divisor of S: no padding
        if S % t == 0:
            return t
        t -= 128
    return max((cap // 128) * 128, 128)                # fall back to padding the tail


def conv_upsample(x, weight, bias, *, ts=None):
    """x: (N, C, H, W); weight: (C_in, C_out, 2, 2) (PyTorch ConvTranspose2d); bias: (C,)."""
    N, C, H, W = x.shape
    assert weight.shape == (C, C, 2, 2)
    dtype = x.dtype
    S = H * W
    itemsize = jnp.dtype(dtype).itemsize

    # Pack taps along rows and fold the nearest-upsample residual into the weight:
    #   wt[k*C + co, ci] = weight[ci, co, kh, kw] + (ci == co),  k = 2*kh + kw
    wt = jnp.transpose(weight, (2, 3, 1, 0)).reshape(4 * C, C)          # (kh, kw, co, ci)
    wt = (wt.astype(jnp.float32)
          + jnp.tile(jnp.eye(C, dtype=jnp.float32), (4, 1))).astype(weight.dtype)
    b4 = jnp.tile(bias.astype(jnp.float32), (4,)).reshape(4 * C, 1)     # row k*C+co -> bias[co]

    # Read x straight from NCHW as (C, H*W) slabs (free reshape, no transpose pass).
    xs = x.reshape(N, C, S)

    ts = _pick_tile(S, C, itemsize, ts)
    S_pad = pl.cdiv(S, ts) * ts
    if S_pad != S:
        xs = jnp.pad(xs, ((0, 0), (0, 0), (0, S_pad - S)))              # rare fallback path

    grid = (N, S_pad // ts)

    vmem_bytes = (2 * (C * ts + 4 * C * ts) * itemsize                  # double-buffered x/out
                  + 4 * C * C * itemsize + 4 * C * 4                    # weight + bias
                  + 4 * C * ts * 4)                                     # f32 matmul result
    vmem_limit = int(min(max(vmem_bytes + (8 << 20), 32 << 20), 56 << 20))

    y = pl.pallas_call(
        _conv_upsample_kernel,
        out_shape=jax.ShapeDtypeStruct((N, 4 * C, S_pad), dtype),
        grid_spec=pltpu.PrefetchScalarGridSpec(
            num_scalar_prefetch=0,
            grid=grid,
            in_specs=[
                pl.BlockSpec((4 * C, C), lambda n, s: (0, 0)),          # folded weight (resident)
                pl.BlockSpec((4 * C, 1), lambda n, s: (0, 0)),          # f32 bias (resident)
                pl.BlockSpec((None, C, ts), lambda n, s: (n, 0, s)),    # x slab (NCHW native)
            ],
            out_specs=pl.BlockSpec((None, 4 * C, ts), lambda n, s: (n, 0, s)),
        ),
        compiler_params=pltpu.CompilerParams(
            dimension_semantics=("parallel", "parallel"),
            vmem_limit_bytes=vmem_limit,
        ),
    )(wt, b4, xs)

    # Sub-pixel scatter back to NCHW: (N, 4C, S) -> (N, kh, kw, C, H, W) -> (N, C, 2H, 2W).
    y = y[:, :, :S]
    y = y.reshape(N, 2, 2, C, H, W)
    y = jnp.transpose(y, (0, 3, 4, 1, 5, 2)).reshape(N, C, 2 * H, 2 * W)
    return y


def _reference(x, weight, bias):
    """Pure-JAX reference of the PyTorch forward (nearest x2 upsample + ConvTranspose2d(2,2,0))."""
    N, C, H, W = x.shape
    up = jnp.repeat(jnp.repeat(x, 2, axis=2), 2, axis=3)
    dx = jnp.einsum('nihw,iokl->nohkwl', x, weight).reshape(N, C, 2 * H, 2 * W)
    return up + dx + bias[None, :, None, None]


if __name__ == "__main__":
    key = jax.random.PRNGKey(0)
    k1, k2, k3, k4, k5, k6, k7, k8, k9 = jax.random.split(key, 9)

    # Case 1: small C (lane-dense small-channel path), f32, single tile (no padding).
    N, C, H, W = 2, 4, 16, 16
    x = jax.random.normal(k1, (N, C, H, W), dtype=jnp.float32)
    weight = 0.1 * jax.random.normal(k2, (C, C, 2, 2), dtype=jnp.float32)
    bias = 0.1 * jax.random.normal(k3, (C,), dtype=jnp.float32)

    out = jax.block_until_ready(conv_upsample(x, weight, bias))
    ref = _reference(x, weight, bias)
    assert out.shape == (N, C, 2 * H, 2 * W)
    assert jnp.allclose(out, ref, atol=1e-5, rtol=1e-5), float(jnp.max(jnp.abs(out - ref)))

    # Case 2: C multiple of 32 (full-lane matmul regime), small image (S=64, full-extent tile), f32.
    N2, C2, H2, W2 = 1, 128, 8, 8
    x2 = jax.random.normal(k4, (N2, C2, H2, W2), dtype=jnp.float32)
    w2 = 0.05 * jax.random.normal(k5, (C2, C2, 2, 2), dtype=jnp.float32)
    b2 = 0.1 * jax.random.normal(k6, (C2,), dtype=jnp.float32)

    out2 = jax.block_until_ready(conv_upsample(x2, w2, b2))
    ref2 = _reference(x2, w2, b2)
    assert out2.shape == (N2, C2, 2 * H2, 2 * W2)
    assert jnp.allclose(out2, ref2, atol=1e-4, rtol=1e-4), float(jnp.max(jnp.abs(out2 - ref2)))

    # Case 3: bf16 IO path (native MXU dtype, f32 accumulation), looser tolerance.
    x_bf = x.astype(jnp.bfloat16)
    w_bf = weight.astype(jnp.bfloat16)
    b_bf = bias.astype(jnp.bfloat16)
    out_bf = jax.block_until_ready(conv_upsample(x_bf, w_bf, b_bf))
    ref_bf = _reference(x_bf.astype(jnp.float32), w_bf.astype(jnp.float32),
                        b_bf.astype(jnp.float32))
    assert out_bf.dtype == jnp.bfloat16
    assert jnp.allclose(out_bf.astype(jnp.float32), ref_bf, atol=5e-2, rtol=5e-2), \
        float(jnp.max(jnp.abs(out_bf.astype(jnp.float32) - ref_bf)))

    # Case 4: forced small tile -> exercises the multi-tile grid path (128-aligned divisor of S).
    N4, C4, H4, W4 = 1, 8, 64, 64
    x4 = jax.random.normal(k7, (N4, C4, H4, W4), dtype=jnp.float32)
    w4 = 0.1 * jax.random.normal(k8, (C4, C4, 2, 2), dtype=jnp.float32)
    b4_ = 0.1 * jax.random.normal(k9, (C4,), dtype=jnp.float32)
    out4 = jax.block_until_ready(conv_upsample(x4, w4, b4_, ts=512))
    ref4 = _reference(x4, w4, b4_)
    assert out4.shape == (N4, C4, 2 * H4, 2 * W4)
    assert jnp.allclose(out4, ref4, atol=1e-4, rtol=1e-4), float(jnp.max(jnp.abs(out4 - ref4)))

    print("KERNEL_OK")
</pallas_src>

<mosaic_0001>
module attributes {stable_mosaic.version = 11 : i64} {
  func.func @_conv_upsample_kernel(%arg0: i32, %arg1: i32, %arg2: memref<16x4xf32, #tpu.memory_space<vmem>>, %arg3: memref<16x1xf32, #tpu.memory_space<vmem>>, %arg4: memref<1x4x256xf32, #tpu.memory_space<vmem>>, %arg5: memref<1x16x256xf32, #tpu.memory_space<vmem>>) attributes {dimension_semantics = [#tpu.dimension_semantics<parallel>, #tpu.dimension_semantics<parallel>], iteration_bounds = array<i64: 2, 1>, scalar_prefetch = 0 : i64, scratch_operands = 0 : i64, tpu.core_type = #tpu.core_type<tc>, window_params = [{pipeline_mode = #tpu.pipeline_mode<synchronous>, transform_indices = @transform_0, window_bounds = array<i64: 16, 4>}, {pipeline_mode = #tpu.pipeline_mode<synchronous>, transform_indices = @transform_1, window_bounds = array<i64: 16, 1>}, {transform_indices = @transform_2, window_bounds = array<i64: 1, 4, 256>}, {transform_indices = @transform_3, window_bounds = array<i64: 1, 16, 256>}]} {
    %c0 = arith.constant 0 : index
    %c0_0 = arith.constant 0 : index
    %0 = vector.load %arg2[%c0, %c0_0] : memref<16x4xf32, #tpu.memory_space<vmem>>, vector<16x4xf32>
    %c0_1 = arith.constant 0 : index
    %c0_2 = arith.constant 0 : index
    %c0_3 = arith.constant 0 : index
    %1 = vector.load %arg4[%c0_1, %c0_2, %c0_3] : memref<1x4x256xf32, #tpu.memory_space<vmem>>, vector<1x4x256xf32>
    %2 = vector.shape_cast %1 : vector<1x4x256xf32> to vector<4x256xf32>
    %cst = arith.constant dense<0.000000e+00> : vector<16x256xf32>
    %3 = tpu.matmul %0, %2, %cst {dimension_numbers = #tpu.dot_dimension_numbers<[1], [0], [0], [1], [0, 0, 1, 1], [], []>} : vector<16x4xf32>, vector<4x256xf32>, vector<16x256xf32> -> vector<16x256xf32>
    %c0_4 = arith.constant 0 : index
    %c0_5 = arith.constant 0 : index
    %4 = vector.load %arg3[%c0_4, %c0_5] : memref<16x1xf32, #tpu.memory_space<vmem>>, vector<16x1xf32>
    %5 = vector.broadcast %4 : vector<16x1xf32> to vector<16x256xf32>
    %6 = arith.addf %3, %5 : vector<16x256xf32>
    %c0_6 = arith.constant 0 : index
    %c0_7 = arith.constant 0 : index
    %c0_8 = arith.constant 0 : index
    %7 = vector.load %arg5[%c0_6, %c0_7, %c0_8] : memref<1x16x256xf32, #tpu.memory_space<vmem>>, vector<1x16x256xf32>
    %8 = vector.shape_cast %7 : vector<1x16x256xf32> to vector<16x256xf32>
    %9 = vector.shape_cast %6 : vector<16x256xf32> to vector<1x16x256xf32>
    tpu.vector_store %arg5[%c0_6, %c0_7, %c0_8], %9 {strides = array<i32>} : memref<1x16x256xf32, #tpu.memory_space<vmem>>, vector<1x16x256xf32>,
    return
  }
  func.func @transform_0(%arg0: i32, %arg1: i32) -> (i32, i32) {
    %c0_i32 = arith.constant 0 : i32
    %c0_i32_0 = arith.constant 0 : i32
    %c0_i32_1 = arith.constant 0 : i32
    return %c0_i32, %c0_i32_0 : i32, i32
  }
  func.func @transform_1(%arg0: i32, %arg1: i32) -> (i32, i32) {
    %c0_i32 = arith.constant 0 : i32
    %c0_i32_0 = arith.constant 0 : i32
    %c0_i32_1 = arith.constant 0 : i32
    return %c0_i32, %c0_i32_0 : i32, i32
  }
  func.func @transform_2(%arg0: i32, %arg1: i32) -> (i32, i32, i32) {
    %c0_i32 = arith.constant 0 : i32
    %c0_i32_0 = arith.constant 0 : i32
    return %arg0, %c0_i32, %arg1 : i32, i32, i32
  }
  func.func @transform_3(%arg0: i32, %arg1: i32) -> (i32, i32, i32) {
    %c0_i32 = arith.constant 0 : i32
    %c0_i32_0 = arith.constant 0 : i32
    return %arg0, %c0_i32, %arg1 : i32, i32, i32
  }
}

</mosaic_0001>

<llo_original>
// kernel: tpu_custom_call.1
$region0: #{tpu_custom_call.1}
  #allocation0 [shape = 'u32[]', space=smem, size = 0x4, offset = 0x4, fixed_abs, tag = 'smem constant byte address 0x4 - core index']
  #allocation1 [shape = 'u32[144,128]{1,0:T(1,128)}', space=vmem, size = 0x12000, scoped, tag = 'internal scratch']
  %s0 = inlined_call_operand.vmem [shape: f32[16,4], index: 0, kind: input, shape index: {}]
  %s1 = inlined_call_operand.vmem [shape: f32[16,1], index: 1, kind: input, shape index: {}]
  %s2 = inlined_call_operand.vmem [shape: f32[2,4,256], index: 2, kind: input, shape index: {}]
  %s3 = inlined_call_operand.hbm [shape: f32[2,16,256], index: 3, kind: output, shape index: {}]
  %s4 = sld [smem:[#allocation0]]
  $region45: #{tpu_custom_call.1} parent=0
    _
  %s6 = ssub.s32 1, %s4
  %s7 = scalar_select 0, %s6, %s4
  $region1: #{tpu_custom_call.1} parent=0
    #allocation2 [shape = 'u8[32768]{0}', space=vmem, size = 0x8000, scoped, tag = 'output window, operand 0']
    #allocation3 [shape = 's32[2]{0}', space=sflag, size = 0x8, scoped, tag = 'scoped memory for tpu_custom_call.1']
    %8 = vsyncpa [#allocation3], 0
    %s9 = scalar_lea.sflag [#allocation3], 1
    %10 = vsyncpa %s9, 0
    loop: start=0, step=1, limit=4
    $region2: #{tpu_custom_call.1} parent=1 // loop_pre_header
      _
    $region3: #{tpu_custom_call.1} parent=1 // loop_header
      %s12 = sphi 0, %s16
      %p13 = scmp.ge.s32.totalorder %s12, 4
      %s19 = sphi 0, %s31
      %s20 = sphi 0, %s27
      %s21 = sphi 0, %s19
      %s22 = sphi 0, %s20
      %s23 = sphi 0, %s21
      %s24 = sphi 0, %s22
      %s32 = sphi 0, %s32
      %s34 = sphi 0, %s32
      %s35 = sphi 0, %s34
      %s49 = sphi 0, %s35
      %s53 = sphi 0, %s53
      %s55 = sphi 0, %s53
      %s56 = sphi 0, %s55
      %s70 = sphi 0, %s56
      %s78 = sphi 0, %s80
      %s81 = sphi 0, %s78
      %s82 = sphi 0, %s81
      %s98 = sphi 0, %s82
      %s106 = sphi 0, %s108
      %s109 = sphi 0, %s106
      %s110 = sphi 0, %s109
      %s126 = sphi 0, %s110
    $region4: #{tpu_custom_call.1} parent=1 // loop_header_branch
      %15 = sbr.rel (%p13) target = $region8
    $region5: #{tpu_custom_call.1} parent=1 // loop_body
      %s17 = ssub.s32 %s12, 1
      %s18 = ssub.s32 %s12, 2
      %s25 = sadd.s32 1, %s20
      %p26 = scmp.ge.s32.totalorder %s25, 1
      %s27 = scalar_select %p26, 0, %s25
      %s28 = sadd.s32 1, %s19
      %s29 = scalar_select %p26, %s28, %s19
      %p30 = scmp.ge.s32.totalorder %s29, 2
      %s31 = scalar_select %p30, 0, %s29
      %s33 = sadd.s32 %s32, 1
      %p36 = scmp.eq.s32.totalorder %s12, 1
      %p37 = scmp.ne.s32.totalorder %s32, %s34
      %p38 = scmp.eq.s32.totalorder %s12, 0
      %p39 = por %p37, %p38
      %p40 = scmp.ne.s32.totalorder %s32, %s34
      %p41 = scmp.eq.s32.totalorder %s17, 1
      %p42 = por %p40, %p41
      %p43 = scmp.ne.s32.totalorder %s34, %s35
      %p44 = scmp.eq.s32.totalorder %s17, 0
      %p45 = por %p43, %p44
      %p46 = scmp.ne.s32.totalorder %s34, %s35
      %p47 = scmp.eq.s32.totalorder %s18, 1
      %p48 = por %p46, %p47
      %p50 = scmp.ne.s32.totalorder %s35, %s49
      %p51 = scmp.eq.s32.totalorder %s18, 0
      %p52 = por %p50, %p51
      %s54 = sadd.s32 %s53, 1
      %p57 = scmp.eq.s32.totalorder %s12, 1
      %p58 = scmp.ne.s32.totalorder %s53, %s55
      %p59 = scmp.eq.s32.totalorder %s12, 0
      %p60 = por %p58, %p59
      %p61 = scmp.ne.s32.totalorder %s53, %s55
      %p62 = scmp.eq.s32.totalorder %s17, 1
      %p63 = por %p61, %p62
      %p64 = scmp.ne.s32.totalorder %s55, %s56
      %p65 = scmp.eq.s32.totalorder %s17, 0
      %p66 = por %p64, %p65
      %p67 = scmp.ne.s32.totalorder %s55, %s56
      %p68 = scmp.eq.s32.totalorder %s18, 1
      %p69 = por %p67, %p68
      %p71 = scmp.ne.s32.totalorder %s56, %s70
      %p72 = scmp.eq.s32.totalorder %s18, 0
      %p73 = por %p71, %p72
      %s74 = ssub.s32 %s19, %s31
      %s75 = ssub.s32 %s20, %s27
      %s76 = sor.u32 %s74, %s75
      %p77 = scmp.eq.s32.totalorder %s76, 0
      %s79 = sadd.s32 %s78, 1
      %s80 = scalar_select %p77, %s78, %s79
      %p83 = pneg %p77
      %p84 = scmp.eq.s32.totalorder %s12, 1
      %p85 = por %p83, %p84
      %p86 = scmp.ne.s32.totalorder %s78, %s81
      %p87 = scmp.eq.s32.totalorder %s12, 0
      %p88 = por %p86, %p87
      %p89 = scmp.ne.s32.totalorder %s78, %s81
      %p90 = scmp.eq.s32.totalorder %s17, 1
      %p91 = por %p89, %p90
      %p92 = scmp.ne.s32.totalorder %s81, %s82
      %p93 = scmp.eq.s32.totalorder %s17, 0
      %p94 = por %p92, %p93
      %p95 = scmp.ne.s32.totalorder %s81, %s82
      %p96 = scmp.eq.s32.totalorder %s18, 1
      %p97 = por %p95, %p96
      %p99 = scmp.ne.s32.totalorder %s82, %s98
      %p100 = scmp.eq.s32.totalorder %s18, 0
      %p101 = por %p99, %p100
      %s102 = ssub.s32 %s19, %s31
      %s103 = ssub.s32 %s20, %s27
      %s104 = sor.u32 %s102, %s103
      %p105 = scmp.eq.s32.totalorder %s104, 0
      %s107 = sadd.s32 %s106, 1
      %s108 = scalar_select %p105, %s106, %s107
      %p111 = pneg %p105
      %p112 = scmp.eq.s32.totalorder %s12, 1
      %p113 = por %p111, %p112
      %p114 = scmp.ne.s32.totalorder %s106, %s109
      %p115 = scmp.eq.s32.totalorder %s12, 0
      %p116 = por %p114, %p115
      %p117 = scmp.ne.s32.totalorder %s106, %s109
      %p118 = scmp.eq.s32.totalorder %s17, 1
      %p119 = por %p117, %p118
      %p120 = scmp.ne.s32.totalorder %s109, %s110
      %p121 = scmp.eq.s32.totalorder %s17, 0
      %p122 = por %p120, %p121
      %p123 = scmp.ne.s32.totalorder %s109, %s110
      %p124 = scmp.eq.s32.totalorder %s18, 1
      %p125 = por %p123, %p124
      %p127 = scmp.ne.s32.totalorder %s110, %s126
      %p128 = scmp.eq.s32.totalorder %s18, 0
      %p129 = por %p127, %p128
      %p130 = scmp.le.s32.totalorder 1, %s12
      %p131 = scmp.lt.s32.totalorder %s12, 3
      %p132 = pnand %p130, %p131
      %p133 = pneg %p132
      // Predicated region
      $region9: #{tpu_custom_call.1} parent=5 // pred_check
        _
      $region10: #{tpu_custom_call.1} parent=5 // pred_check_branch
        %135 = sbr.rel (%p132) target = $region12
      $region11: #{tpu_custom_call.1} parent=5 // pred_region
        %s136 = ssub.s32 %s12, 1
        // Predicated region
        $region13: #{tpu_custom_call.1} parent=11 // pred_check
          %p137 = pneg %p45
        $region14: #{tpu_custom_call.1} parent=11 // pred_check_branch
          %139 = sbr.rel (%p137) target = $region16
        $region15: #{tpu_custom_call.1} parent=11 // pred_region
          _
        $region16: #{tpu_custom_call.1} parent=11 // pred_fallthru
          _
        // Predicated region
        $region17: #{tpu_custom_call.1} parent=11 // pred_check
          %p140 = pneg %p66
        $region18: #{tpu_custom_call.1} parent=11 // pred_check_branch
          %142 = sbr.rel (%p140) target = $region20
        $region19: #{tpu_custom_call.1} parent=11 // pred_region
          _
        $region20: #{tpu_custom_call.1} parent=11 // pred_fallthru
          _
      $region12: #{tpu_custom_call.1} parent=5 // pred_fallthru
        _
      %p143 = scmp.lt.s32.totalorder %s12, 2
      // Predicated region
      $region21: #{tpu_custom_call.1} parent=5 // pred_check
        %p144 = pneg %p143
      $region22: #{tpu_custom_call.1} parent=5 // pred_check_branch
        %146 = sbr.rel (%p144) target = $region24
      $region23: #{tpu_custom_call.1} parent=5 // pred_region
        // Predicated region
        $region25: #{tpu_custom_call.1} parent=23 // pred_check
          %p147 = pneg %p88
        $region26: #{tpu_custom_call.1} parent=23 // pred_check_branch
          %149 = sbr.rel (%p147) target = $region28
        $region27: #{tpu_custom_call.1} parent=23 // pred_region
          %s150 = smul.u32 2, %s20
          %p151 = scmp.lt.s32.totalorder %s19, 1
          %s152 = scalar_select %p151, %s19, 1
          %p153 = scmp.lt.s32.totalorder %s150, 1
          %s154 = scalar_select %p153, %s150, 1
          %s155 = smul.addr %s152, 2
          %s156 = sadd.s32 %s154, %s155
          %s157 = smul.addr %s156, 4
          %s158 = scalar_lea.vmem %s2, %s157
          %s159 = smul.u32 2, %s20
        $region28: #{tpu_custom_call.1} parent=23 // pred_fallthru
          _
      $region24: #{tpu_custom_call.1} parent=5 // pred_fallthru
        _
      %p160 = scmp.le.s32.totalorder 1, %s12
      %p161 = scmp.lt.s32.totalorder %s12, 3
      %p162 = pnand %p160, %p161
      %p163 = pneg %p162
      // Predicated region
      $region29: #{tpu_custom_call.1} parent=5 // pred_check
        _
      $region30: #{tpu_custom_call.1} parent=5 // pred_check_branch
        %165 = sbr.rel (%p162) target = $region32
      $region31: #{tpu_custom_call.1} parent=5 // pred_region
        %s166 = ssub.s32 %s12, 1
        %p167 = pneg %p45
        %p168 = pneg %p42
        %p169 = pneg %p66
        %p170 = pneg %p63
        %s171 = smul.u32 2, %s22
        %p172 = scmp.lt.s32.totalorder %s21, 1
        %s173 = scalar_select %p172, %s21, 1
        %p174 = scmp.lt.s32.totalorder %s171, 1
        %s175 = scalar_select %p174, %s171, 1
        %s176 = smul.addr %s173, 2
        %s177 = sadd.s32 %s175, %s176
        %s178 = smul.addr %s177, 4
        %s179 = scalar_lea.vmem %s2, %s178
        %p180 = pneg %p94
        %p181 = pneg %p91
        %p182 = pneg %p122
        %p183 = pneg %p119
        %s184 = sand.u32 %s109, 1
        %s185 = scalar_lea.sflag [#allocation3], %s184
        %s186 = sand.u32 %s109, 1
        %s187 = smul.addr %s186, 32
        %s188 = scalar_lea.vmem [#allocation2], %s187
        %s189 = smul.u32 2, %s22
        %p190 = scmp.lt.s32.totalorder %s21, 1
        %s191 = scalar_select %p190, %s21, 1
        %p192 = scmp.lt.s32.totalorder %s189, 1
        %s193 = scalar_select %p192, %s189, 1
        %s194 = smul.addr %s191, 2
        %s195 = sadd.s32 %s193, %s194
        %s196 = smul.addr %s195, 4
        %s197 = scalar_lea.vmem %s2, %s196
        %s198 = smul.u32 2, %s22
        %s199 = smul.u32 2, %s22
        %v200 = vld [vmem:[%s0] sm:$0xff]
        %v201 = vld [vmem:[%s0 + $0x8] sm:$0xff]
        %v202 = vld [vmem:[%s197] sm:$0xff]
        %v203 = vld [vmem:[%s1] sm:$0xff]
        %v204 = vld [vmem:[%s1 + $0x8] sm:$0xff]
        %206 = vset.pattern.permute.xlu0 0
        %207 = vperm.xlu0 %206, %v203
        %v208 = vpop.permute.xlu0 %207
        %211 = vset.pattern.permute.xlu0 0
        %212 = vperm.xlu0 %211, %v204
        %v213 = vpop.permute.xlu0 %212
        %v216 = vcombine.high %v202, %v202
        %vm217 = vcmask 31744
        %v219 = vsel %vm217, %v200, 0
        %v222 = vsel %vm217, %v201, 0
        %vm224 = vcmask 1043456
        %v225 = vsel %vm224, %v202, 0
        %v227 = vsel %vm224, %v216, 0
        %229 = vmatprep.subr.mxu0 %v227
        %230 = vmatpush1.msra.mxu0 %v225
        %231 = vmatprep.subr.mxu0 0.0
        %232 = vmatpush1.msra.mxu0 0.0
        %233 = vmatprep.subr.mxu0 0.0
        %234 = vmatpush1.msra.mxu0 0.0
        %235 = vmatprep.subr.mxu0 0.0
        %236 = vmatpush1.msra.mxu0 0.0
        %237 = vmatprep.subr.mxu0 0.0
        %238 = vmatpush1.msra.mxu0 0.0
        %239 = vmatprep.subr.mxu0 0.0
        %240 = vmatpush1.msra.mxu0 0.0
        %241 = vmatprep.subr.mxu0 0.0
        %242 = vmatpush1.msra.mxu0 0.0
        %243 = vmatprep.subr.mxu0 0.0
        %244 = vmatpush1.msra.mxu0 0.0
        %245 = vmatprep.subr.mxu0 0.0
        %246 = vmatpush1.msra.mxu0 0.0
        %247 = vmatprep.subr.mxu0 0.0
        %248 = vmatpush1.msra.mxu0 0.0
        %249 = vmatprep.subr.mxu0 0.0
        %250 = vmatpush1.msra.mxu0 0.0
        %251 = vmatprep.subr.mxu0 0.0
        %252 = vmatpush1.msra.mxu0 0.0
        %253 = vmatprep.subr.mxu0 0.0
        %254 = vmatpush1.msra.mxu0 0.0
        %255 = vmatprep.subr.mxu0 0.0
        %256 = vmatpush1.msra.mxu0 0.0
        %257 = vmatprep.subr.mxu0 0.0
        %258 = vmatpush1.msra.mxu0 0.0
        %259 = vmatprep.subr.mxu0 0.0
        %260 = vmatpush1.msra.mxu0 0.0
        %261 = vmatprep.subr.mxu0 0.0
        %262 = vmatpush1.msra.mxu0 0.0
        %263 = vmatprep.subr.mxu0 0.0
        %264 = vmatpush1.msra.mxu0 0.0
        %265 = vmatprep.subr.mxu0 0.0
        %266 = vmatpush1.msra.mxu0 0.0
        %267 = vmatprep.subr.mxu0 0.0
        %268 = vmatpush1.msra.mxu0 0.0
        %269 = vmatprep.subr.mxu0 0.0
        %270 = vmatpush1.msra.mxu0 0.0
        %271 = vmatprep.subr.mxu0 0.0
        %272 = vmatpush1.msra.mxu0 0.0
        %273 = vmatprep.subr.mxu0 0.0
        %274 = vmatpush1.msra.mxu0 0.0
        %275 = vmatprep.subr.mxu0 0.0
        %276 = vmatpush1.msra.mxu0 0.0
        %277 = vmatprep.subr.mxu0 0.0
        %278 = vmatpush1.msra.mxu0 0.0
        %279 = vmatprep.subr.mxu0 0.0
        %280 = vmatpush1.msra.mxu0 0.0
        %281 = vmatprep.subr.mxu0 0.0
        %282 = vmatpush1.msra.mxu0 0.0
        %283 = vmatprep.subr.mxu0 0.0
        %284 = vmatpush1.msra.mxu0 0.0
        %285 = vmatprep.subr.mxu0 0.0
        %286 = vmatpush1.msra.mxu0 0.0
        %287 = vmatprep.subr.mxu0 0.0
        %288 = vmatpush1.msra.mxu0 0.0
        %289 = vmatprep.subr.mxu0 0.0
        %290 = vmatpush1.msra.mxu0 0.0
        %291 = vmatprep.subr.mxu0 0.0
        %292 = vmatpush1.msra.mxu0 0.0
        %293 = vmatprep.mubr.f32.mxu0 0.0
        %294 = vmatmul.mubr.f32.gmra.mrb[0].mxu0 %v219
        %v295 = vpop.f32.mrb[0].mxu0
        %v296 = vadd.f32 %v208, %v295
        %v297 = vpop.f32.mrb[0].mxu0
        %v298 = vadd.f32 %v208, %v297
        %299 = vmatprep.mubr.f32.mxu0 0.0
        %300 = vmatmul.mubr.f32.gmra.mrb[0].mxu0 %v222
        %v301 = vpop.f32.mrb[0].mxu0
        %v302 = vadd.f32 %v213, %v301
        %v303 = vpop.f32.mrb[0].mxu0
        %v304 = vadd.f32 %v213, %v303
        %305 = vdwg.mxu0
        %306 = vst [vmem:[%s188] sm:$0xff] %v296
        %307 = vst [vmem:[%s188 + $0x8] sm:$0xff] %v298
        %308 = vst [vmem:[%s188 + $0x10] sm:$0xff] %v302
        %309 = vst [vmem:[%s188 + $0x18] sm:$0xff] %v304
        %s310 = sand.u32 %s109, 1
        %s311 = scalar_lea.sflag [#allocation3], %s310
        %s312 = sand.u32 %s109, 1
        %s313 = smul.addr %s312, 32
        %s314 = scalar_lea.vmem [#allocation2], %s313
        // Predicated region
        $region33: #{tpu_custom_call.1} parent=31 // pred_check
          %p315 = pneg %p119
        $region34: #{tpu_custom_call.1} parent=31 // pred_check_branch
          %317 = sbr.rel (%p315) target = $region36
        $region35: #{tpu_custom_call.1} parent=31 // pred_region
          %s318 = smul.u32 2, %s22
          %s320 = ssub.s32 512, 512
          %321 = vsyncadd %s311, %s320
          %s322 = smul.addr %s21, 4
          %s323 = sadd.s32 %s318, %s322
          %s324 = smul.addr %s323, 128
          %s325 = scalar_lea.hbm %s3, %s324
          %s326 = sshll.u32 %s314, 4
          %s327 = int_to_ptr.vmem [resolvable:$true] %s326
          %332 = dma.vmem_to_hbm [thread:$0]  %s327, 512, %s325, %s311, 256, 256, 16
        $region36: #{tpu_custom_call.1} parent=31 // pred_fallthru
          _
      $region32: #{tpu_custom_call.1} parent=5 // pred_fallthru
        _
      %p333 = scmp.le.s32.totalorder 2, %s12
      // Predicated region
      $region37: #{tpu_custom_call.1} parent=5 // pred_check
        %p334 = pneg %p333
      $region38: #{tpu_custom_call.1} parent=5 // pred_check_branch
        %336 = sbr.rel (%p334) target = $region40
      $region39: #{tpu_custom_call.1} parent=5 // pred_region
        %s337 = ssub.s32 %s12, 2
        // Predicated region
        $region41: #{tpu_custom_call.1} parent=39 // pred_check
          %p338 = pneg %p125
        $region42: #{tpu_custom_call.1} parent=39 // pred_check_branch
          %340 = sbr.rel (%p338) target = $region44
        $region43: #{tpu_custom_call.1} parent=39 // pred_region
          %s341 = sand.u32 %s110, 1
          %s342 = scalar_lea.sflag [#allocation3], %s341
          %s343 = sand.u32 %s110, 1
          %s344 = smul.addr %s343, 32
          %s345 = scalar_lea.vmem [#allocation2], %s344
          %346 = dma.done %s342, 512
        $region44: #{tpu_custom_call.1} parent=39 // pred_fallthru
          _
      $region40: #{tpu_custom_call.1} parent=5 // pred_fallthru
        _
    $region6: #{tpu_custom_call.1} parent=1 // loop_footer
      %s16 = sadd.s32 1, %s12
    $region7: #{tpu_custom_call.1} parent=1 // loop_footer_branch
      %11 = sbr.rel target = $region3
    $region8: #{tpu_custom_call.1} parent=1 // loop_exit
      _
    %347 = vsyncpa [#allocation3], 1
    %s348 = scalar_lea.sflag [#allocation3], 1
    %349 = vsyncpa %s348, 1

</llo_original>
